<compile_context>
chip_gen: v6e
topology: v6e:2x2x1
jax: 0.10.0
libtpu: 0.0.40
codegen_flags: <defaults>
</compile_context>

<pallas_src>
import numpy as np
from itertools import permutations

import jax
import jax.numpy as jnp
from jax.experimental import pallas as pl
from jax.experimental.pallas import tpu as pltpu

LANE = 128
MAX_TILE_M = 512      # 512-row tiles reach ~85% of HBM roofline on v6e


def _round_up(n, m):
    return ((n + m - 1) // m) * m


def _choose_tile(n):
    # Aim for >=2 grid steps (v7x megacore) without padding tiny row counts to
    # a huge tile; rows are a multiple of 16 (bf16 sublane packing).
    t = _round_up(max((n + 1) // 2, 1), 16)
    return max(16, min(t, MAX_TILE_M))


def _pad_rows(x2d, tile):
    n = x2d.shape[0]
    n_pad = _round_up(n, tile)
    if n_pad != n:
        x2d = jnp.pad(x2d, ((0, n_pad - n), (0, 0)))
    return x2d, n_pad


def _compiler_params():
    # parallel row grid -> megacore sharding on v7x; modest explicit VMEM budget
    return pltpu.CompilerParams(
        dimension_semantics=("parallel",),
        vmem_limit_bytes=32 * 1024 * 1024,
    )


# ----------------------------------------------------------------------------
# Pallas kernels
# ----------------------------------------------------------------------------
def _ner_kernel(x_ref, w1_ref, b1_ref, w2_ref, b2_ref, logits_ref, sm_ref):
    # NERModule(n_layers=2): Linear -> Dropout(identity, eval) -> ReLU -> Linear
    x = x_ref[...]                                                        # (TM, D) bf16
    h = jnp.dot(x, w1_ref[...], preferred_element_type=jnp.float32) + b1_ref[...]
    h = jnp.maximum(h, 0.0).astype(jnp.bfloat16)
    logits = jnp.dot(h, w2_ref[...], preferred_element_type=jnp.float32) + b2_ref[...]
    logits_ref[...] = logits.astype(logits_ref.dtype)                    # (TM, 128) bf16
    # softmax in f32 over padded channels: pad bias == -1e30 -> exp underflows to exactly 0
    m = jnp.max(logits, axis=-1, keepdims=True)
    e = jnp.exp(logits - m)
    sm = e * pl.reciprocal(jnp.sum(e, axis=-1, keepdims=True), approx=True)
    sm_ref[...] = sm.astype(sm_ref.dtype)                                # (TM, 128) bf16


def ner_forward(x2d_bf16, w1, b1, w2p, b2p, tile):
    n, d = x2d_bf16.shape                    # n is a multiple of tile (caller pads)
    nerp = w2p.shape[1]                      # 128 (padded ner dim)
    grid = (n // tile,)
    flops = 2 * n * d * (d + nerp)
    bytes_accessed = (n * d * 2 + 2 * n * nerp * 2
                      + (d * d + d * nerp) * 2 + (d + nerp) * 4)
    return pl.pallas_call(
        _ner_kernel,
        out_shape=(jax.ShapeDtypeStruct((n, nerp), jnp.bfloat16),
                   jax.ShapeDtypeStruct((n, nerp), jnp.bfloat16)),
        grid=grid,
        in_specs=[
            pl.BlockSpec((tile, d), lambda i: (i, 0)),
            pl.BlockSpec((d, d), lambda i: (0, 0)),
            pl.BlockSpec((1, d), lambda i: (0, 0)),
            pl.BlockSpec((d, nerp), lambda i: (0, 0)),
            pl.BlockSpec((1, nerp), lambda i: (0, 0)),
        ],
        out_specs=(pl.BlockSpec((tile, nerp), lambda i: (i, 0)),
                   pl.BlockSpec((tile, nerp), lambda i: (i, 0))),
        compiler_params=_compiler_params(),
        cost_estimate=pl.CostEstimate(flops=int(flops), transcendentals=int(n * nerp),
                                      bytes_accessed=int(bytes_accessed)),
    )(x2d_bf16, w1, b1, w2p, b2p)


def _headtail_kernel(x_ref, w1_ref, b1_ref, hw2_ref, hb2_ref, tw2_ref, tb2_ref,
                     h_ref, t_ref):
    # head & tail MLPs fused: shared x read, one (256,1024) first matmul
    x = x_ref[...]                                                        # (TM, 256) bf16
    h1 = jnp.dot(x, w1_ref[...], preferred_element_type=jnp.float32) + b1_ref[...]
    h1 = jnp.maximum(h1, 0.0).astype(jnp.bfloat16)                        # (TM, 1024)
    H = hw2_ref.shape[0]                                                  # 512
    h_ref[...] = (jnp.dot(h1[:, :H], hw2_ref[...],
                          preferred_element_type=jnp.float32)
                  + hb2_ref[...]).astype(h_ref.dtype)
    t_ref[...] = (jnp.dot(h1[:, H:], tw2_ref[...],
                          preferred_element_type=jnp.float32)
                  + tb2_ref[...]).astype(t_ref.dtype)


def headtail_forward(x2d_bf16, w1, b1, hw2, hb2, tw2, tb2, tile):
    n, f = x2d_bf16.shape
    h = hw2.shape[0]
    grid = (n // tile,)
    flops = 2 * n * (f * 2 * h + 2 * h * h)
    bytes_accessed = (n * f * 2 + 2 * n * h * 2
                      + (f * 2 * h + 2 * h * h) * 2 + 4 * h * 4)
    return pl.pallas_call(
        _headtail_kernel,
        out_shape=(jax.ShapeDtypeStruct((n, h), jnp.bfloat16),
                   jax.ShapeDtypeStruct((n, h), jnp.bfloat16)),
        grid=grid,
        in_specs=[
            pl.BlockSpec((tile, f), lambda i: (i, 0)),
            pl.BlockSpec((f, 2 * h), lambda i: (0, 0)),
            pl.BlockSpec((1, 2 * h), lambda i: (0, 0)),
            pl.BlockSpec((h, h), lambda i: (0, 0)),
            pl.BlockSpec((1, h), lambda i: (0, 0)),
            pl.BlockSpec((h, h), lambda i: (0, 0)),
            pl.BlockSpec((1, h), lambda i: (0, 0)),
        ],
        out_specs=(pl.BlockSpec((tile, h), lambda i: (i, 0)),
                   pl.BlockSpec((tile, h), lambda i: (i, 0))),
        compiler_params=_compiler_params(),
        cost_estimate=pl.CostEstimate(flops=int(flops), transcendentals=0,
                                      bytes_accessed=int(bytes_accessed)),
    )(x2d_bf16, w1, b1, hw2, hb2, tw2, tb2)


def _biaffine_kernel(h_ref, t_ref, wbf_ref, g_ref, wlh_ref, wlt_ref, b_ref, o_ref):
    # bil(head, tail) + lin(cat(head, tail)), output padded to 128 lanes.
    head = h_ref[...]                                                     # (TM, 512) bf16
    tail = t_ref[...]
    acc = (jnp.dot(head, wlh_ref[...], preferred_element_type=jnp.float32)
           + jnp.dot(tail, wlt_ref[...], preferred_element_type=jnp.float32)
           + b_ref[...])                                                  # (TM, 128) f32
    H = tail.shape[1]
    rep = wbf_ref.shape[1] // H                                           # = re_dim
    # Bilinear term, block-per-output-channel: no (TM, RE*H) tail_rep copy,
    # all matmul operands bf16, f32 accumulation on the MXU.
    for o in range(rep):
        hw_o = jnp.dot(head, wbf_ref[:, o * H:(o + 1) * H],
                       preferred_element_type=jnp.float32).astype(jnp.bfloat16)
        prod = hw_o * tail                                                # (TM, H) bf16
        acc = acc + jnp.dot(prod, g_ref[o * H:(o + 1) * H, :],
                            preferred_element_type=jnp.float32)           # row-sum -> lane o
    o_ref[...] = acc


def biaffine_forward(head2d, tail2d, wbf, g, wlh, wlt, b, tile):
    n, h = head2d.shape
    rh = wbf.shape[1]
    outp = g.shape[1]
    grid = (n // tile,)
    flops = 2 * n * (h * rh + 2 * h * outp + rh * outp)
    bytes_accessed = (2 * n * h * 2 + n * outp * 4
                      + (h * rh + 2 * h * outp + rh * outp) * 2 + outp * 4)
    return pl.pallas_call(
        _biaffine_kernel,
        out_shape=jax.ShapeDtypeStruct((n, outp), jnp.float32),
        grid=grid,
        in_specs=[
            pl.BlockSpec((tile, h), lambda i: (i, 0)),
            pl.BlockSpec((tile, h), lambda i: (i, 0)),
            pl.BlockSpec((h, rh), lambda i: (0, 0)),
            pl.BlockSpec((rh, outp), lambda i: (0, 0)),
            pl.BlockSpec((h, outp), lambda i: (0, 0)),
            pl.BlockSpec((h, outp), lambda i: (0, 0)),
            pl.BlockSpec((1, outp), lambda i: (0, 0)),
        ],
        out_specs=pl.BlockSpec((tile, outp), lambda i: (i, 0)),
        compiler_params=_compiler_params(),
        cost_estimate=pl.CostEstimate(flops=int(flops), transcendentals=0,
                                      bytes_accessed=int(bytes_accessed)),
    )(head2d, tail2d, wbf, g, wlh, wlt, b)


# ----------------------------------------------------------------------------
# NER tagging scheme (IOBES)
# ----------------------------------------------------------------------------
class IOBESScheme:
    def __init__(self, e_types):
        self.e_types = list(e_types)
        self.tags = ["O"]
        for t in self.e_types:
            for p in ("B", "I", "E", "S"):
                self.tags.append(f"{p}-{t}")
        self._idx = {t: i for i, t in enumerate(self.tags)}

    def index(self, tag):
        return self._idx[tag]


# ----------------------------------------------------------------------------
# BaseIEModel (JAX / Pallas)
# ----------------------------------------------------------------------------
class BaseIEModelPallas:
    def __init__(self, lm_dim, ner_dim, ner_scheme, re_dim, vocab=100,
                 key=jax.random.PRNGKey(0)):
        self.entity_lim = 10
        self.ner_dim = ner_dim
        self.ner_scheme = ner_scheme
        self.lm_dim = lm_dim
        self.re_dim = re_dim
        self.h_dim = 512                       # hard-coded in the reference BaseIEModel
        self.ner_pad = _round_up(ner_dim, LANE)          # 128
        self.feat_dim = lm_dim + self.ner_pad            # 256 lane-friendly in_dim
        self.re_pad = LANE                                # biaffine output padded to 128
        h_dim = self.h_dim

        ks = jax.random.split(key, 10)

        def lin(k, fan_in, fan_out):
            return jax.random.normal(k, (fan_in, fan_out), jnp.float32) / np.sqrt(fan_in)

        # TODO(synk): the pretrained HF transformer (AutoModel.from_pretrained)
        # is replaced by a deterministic embedding-table stub (no checkpoint load).
        self.embed = jax.random.normal(ks[0], (vocab, lm_dim), jnp.float32)

        # --- NER head, output lane dim padded 9 -> 128 (pad bias = -1e30, f32) ---
        self.ner_w1 = lin(ks[1], lm_dim, lm_dim).astype(jnp.bfloat16)
        self.ner_b1 = jnp.zeros((1, lm_dim), jnp.float32)
        w2 = lin(ks[2], lm_dim, ner_dim)
        self.ner_w2 = (jnp.zeros((lm_dim, self.ner_pad), jnp.float32)
                       .at[:, :ner_dim].set(w2)).astype(jnp.bfloat16)
        self.ner_b2 = (jnp.full((1, self.ner_pad), -1e30, jnp.float32)
                       .at[:, :ner_dim].set(0.0))

        # --- RE head/tail first layers fused (in_dim 137 zero-padded to 256) ---
        in_dim = lm_dim + ner_dim
        hw1 = lin(ks[3], in_dim, h_dim)
        tw1 = lin(ks[5], in_dim, h_dim)
        w1 = jnp.zeros((self.feat_dim, 2 * h_dim), jnp.float32)
        w1 = w1.at[:lm_dim, :h_dim].set(hw1[:lm_dim])
        w1 = w1.at[lm_dim:lm_dim + ner_dim, :h_dim].set(hw1[lm_dim:])
        w1 = w1.at[:lm_dim, h_dim:].set(tw1[:lm_dim])
        w1 = w1.at[lm_dim:lm_dim + ner_dim, h_dim:].set(tw1[lm_dim:])
        self.ht_w1 = w1.astype(jnp.bfloat16)
        self.ht_b1 = jnp.zeros((1, 2 * h_dim), jnp.float32)
        self.h_w2 = lin(ks[4], h_dim, h_dim).astype(jnp.bfloat16)
        self.h_b2 = jnp.zeros((1, h_dim), jnp.float32)
        self.t_w2 = lin(ks[6], h_dim, h_dim).astype(jnp.bfloat16)
        self.t_b2 = jnp.zeros((1, h_dim), jnp.float32)

        # --- Bilinear(h,h,re_dim) flattened + 0/1 grouping matrix (bf16-exact) ---
        w_bil = jax.random.normal(ks[7], (re_dim, h_dim, h_dim), jnp.float32) / h_dim
        self.w_bil_flat = (jnp.transpose(w_bil, (1, 0, 2))
                           .reshape(h_dim, re_dim * h_dim)).astype(jnp.bfloat16)
        g = np.zeros((re_dim * h_dim, self.re_pad), np.float32)
        for o in range(re_dim):
            g[o * h_dim:(o + 1) * h_dim, o] = 1.0
        self.group = jnp.asarray(g).astype(jnp.bfloat16)
        self.b_bil = jnp.zeros((1, self.re_pad), jnp.float32)
        # Linear(2*h_dim, re_dim, bias=False), columns zero-padded to 128
        wlin = lin(ks[8], 2 * h_dim, re_dim)
        self.w_lin_h = (jnp.zeros((h_dim, self.re_pad), jnp.float32)
                        .at[:, :re_dim].set(wlin[:h_dim])).astype(jnp.bfloat16)
        self.w_lin_t = (jnp.zeros((h_dim, self.re_pad), jnp.float32)
                        .at[:, :re_dim].set(wlin[h_dim:])).astype(jnp.bfloat16)

    # ---------------- forward ----------------
    def forward(self, token_ids):
        B, T = token_ids.shape
        # language model stub: embedding lookup, drop last token (last_hidden_state[:, :-1])
        hidden = self.embed[token_ids][:, :-1]                     # (B, S, D) f32
        S = T - 1
        n = B * S
        x2d = hidden.reshape(n, self.lm_dim).astype(jnp.bfloat16)
        tile = _choose_tile(n)
        x2d, _ = _pad_rows(x2d, tile)

        logits_p, sm_p = ner_forward(x2d, self.ner_w1, self.ner_b1,
                                     self.ner_w2, self.ner_b2, tile)
        ner = (logits_p[:n, :self.ner_dim].astype(jnp.float32)
               .reshape(B, S, self.ner_dim))
        # (hidden || softmax) feature concat built downstream (hidden already in HBM)
        sm = sm_p[:n].astype(jnp.float32).reshape(B, S, self.ner_pad)
        feat = jnp.concatenate([hidden, sm], axis=-1)              # (B, S, 256)

        feat, ner = feat[:, 1:], ner[:, 1:]                        # ctx (=feat[:, :1]) unused

        # Entity_filter / PAD are data-dependent variable-length ops -> host numpy glue
        l_ents, l_inp = self.entity_filter(np.asarray(feat))
        x_pad, pos_pad = self.pad(l_ents, l_inp)
        if x_pad.shape[1] > self.entity_lim:
            x_pad = x_pad[:, :self.entity_lim, :]
            pos_pad = pos_pad[:, :self.entity_lim, :]
        if x_pad.shape[1] < 2:
            return [ner, None]
        re = self.re_forward(jnp.asarray(x_pad, jnp.float32),
                             jnp.asarray(pos_pad, jnp.int32))
        return [ner, re]

    # ---------------- REModule.forward ----------------
    def re_forward(self, x, positions):
        B, E, F = x.shape                                  # F == feat_dim (256)
        n = B * E
        x2d = x.reshape(n, F).astype(jnp.bfloat16)
        tile = _choose_tile(n)
        x2d, _ = _pad_rows(x2d, tile)
        head2d, tail2d = headtail_forward(x2d, self.ht_w1, self.ht_b1,
                                          self.h_w2, self.h_b2,
                                          self.t_w2, self.t_b2, tile)
        head = head2d[:n].reshape(B, E, self.h_dim)
        tail = tail2d[:n].reshape(B, E, self.h_dim)

        perm = list(permutations(range(E), 2))
        perm_h = jnp.array([p[0] for p in perm], jnp.int32)
        perm_t = jnp.array([p[1] for p in perm], jnp.int32)
        P = len(perm)

        # TODO(synk): these bf16 pair gathers could be folded into the biaffine
        # kernel via scalar-prefetch row indexing; kept as tiny XLA takes here
        # (E <= 10) to keep the lowering simple and robust.
        head_p = jnp.take(head, perm_h, axis=1)                     # (B, P, 512)
        tail_p = jnp.take(tail, perm_t, axis=1)
        positions = positions.reshape(B, -1, 1)
        pos_pairs = jnp.concatenate([jnp.take(positions, perm_h, axis=1),
                                     jnp.take(positions, perm_t, axis=1)], axis=-1)

        m = B * P
        hp2d = head_p.reshape(m, self.h_dim)
        tp2d = tail_p.reshape(m, self.h_dim)
        tile_b = _choose_tile(m)
        hp2d, _ = _pad_rows(hp2d, tile_b)
        tp2d, _ = _pad_rows(tp2d, tile_b)
        re_out = biaffine_forward(hp2d, tp2d, self.w_bil_flat, self.group,
                                  self.w_lin_h, self.w_lin_t, self.b_bil, tile_b)
        re_out = re_out[:m, :self.re_dim].reshape(B, P, self.re_dim)
        return (pos_pairs, re_out)

    # ---------------- Entity_filter (host-side, mirrors the torch loops) ----
    def entity_filter(self, x):
        # TODO(synk): nonzero/vstack with runtime-dependent lengths has no static
        # Pallas equivalent; kept as faithful host-side numpy bookkeeping.
        B, S, F = x.shape
        # softmax channels live at [lm_dim : lm_dim+ner_dim] in the padded feature layout
        amax = np.argmax(x[:, :, self.lm_dim:self.lm_dim + self.ner_dim], axis=-1)
        inputs = [np.zeros((2,), np.int64)]
        entities = [np.zeros((F,), np.float32)]
        for t in self.ner_scheme.e_types:
            iB = self.ner_scheme.index('B-' + t)
            iE = self.ner_scheme.index('E-' + t)
            iS = self.ner_scheme.index('S-' + t)
            indB = np.argwhere(amax == iB)
            indE = np.argwhere(amax == iE)
            indS = np.argwhere(amax == iS)
            for r in indS:
                inputs.append(r.astype(np.int64))
                entities.append(x[r[0], r[1]].astype(np.float32))
            end = np.array([-1, -1], np.int64)
            for i in indB:
                start = i
                if start[0] != end[0]:
                    end = np.array([-1, -1], np.int64)
                if start[1] > end[1]:
                    ind = np.argwhere(indE[:, 0] == i[0])[:, 0] if indE.size else np.zeros((0,), np.int64)
                    tmp = indE[ind] if indE.size else np.zeros((0, 2), np.int64)
                    if len(tmp) > 0:
                        tmp2 = np.argwhere(tmp[:, 1] > i[1])[:, 0]
                        if len(tmp2) > 0:
                            end = indE[ind[tmp2[0]]].astype(np.int64)
                        else:
                            end = np.array([i[0], S], np.int64)
                    else:
                        end = np.array([i[0], S], np.int64)
                    entities.append(np.mean(x[int(start[0]), int(start[1]):int(end[1])],
                                            axis=0).astype(np.float32))
                    inputs.append(end)
        inputs = np.stack(inputs)[1:]
        entities = np.stack(entities)[1:]
        l_ents, l_inp = [], []
        for b in range(B):
            sel = inputs[:, 0] == b if inputs.shape[0] else np.zeros((0,), bool)
            l_inp.append((inputs[sel][:, 1:2] + 1).astype(np.int64))
            l_ents.append(entities[sel].astype(np.float32))
        return l_ents, l_inp

    # ---------------- PAD (pad_sequence equivalent) ----------------
    def pad(self, l_ents, l_inp):
        B = len(l_ents)
        F = l_ents[0].shape[1] if l_ents[0].ndim == 2 else self.feat_dim
        max_len = max(e.shape[0] for e in l_ents)
        x_pad = np.zeros((B, max(max_len, 0), F), np.float32)
        pos_pad = np.full((B, max(max_len, 0), 1), -1, np.int64)
        for b in range(B):
            n = l_ents[b].shape[0]
            if n:
                x_pad[b, :n] = l_ents[b]
                pos_pad[b, :n] = l_inp[b]
        return x_pad, pos_pad


# ----------------------------------------------------------------------------
if __name__ == "__main__":
    # TODO(synk): the full IEModel additionally has a NED branch (faiss IVF search
    # + 6-layer TransformerEncoder); only the BaseIEModel NER+RE path is kernelized.
    scheme = IOBESScheme(["PER", "LOC"])
    ner_dim = len(scheme.tags)        # 9
    re_dim = 3
    lm_dim = 128                      # stand-in for the LM hidden size
    B, T = 2, 12
    vocab = 100

    model = BaseIEModelPallas(lm_dim, ner_dim, scheme, re_dim, vocab=vocab,
                              key=jax.random.PRNGKey(0))

    token_ids = jax.random.randint(jax.random.PRNGKey(0), (B, T), 0, vocab)

    # full forward (RE branch runs only if >=2 entities survive the filter)
    out = model.forward(token_ids)
    ner, re = out[0], out[1]
    jax.block_until_ready(ner)
    if re is not None:
        jax.block_until_ready(re[1])
        jax.block_until_ready(re[0])

    # direct RE smoke test so the fused head/tail MLP and biaffine kernels
    # always execute regardless of what the data-dependent entity filter finds
    E = 4
    x_dummy = jax.random.normal(jax.random.PRNGKey(1), (B, E, model.feat_dim), jnp.float32)
    pos_dummy = jnp.arange(B * E, dtype=jnp.int32).reshape(B, E, 1)
    pos_pairs, re_logits = model.re_forward(x_dummy, pos_dummy)
    jax.block_until_ready(re_logits)
    jax.block_until_ready(pos_pairs)

    print("KERNEL_OK")
</pallas_src>

<mosaic_0001>
module attributes {stable_mosaic.version = 11 : i64} {
  func.func @_ner_kernel(%arg0: i32, %arg1: memref<16x128xbf16, #tpu.memory_space<vmem>>, %arg2: memref<128x128xbf16, #tpu.memory_space<vmem>>, %arg3: memref<1x128xf32, #tpu.memory_space<vmem>>, %arg4: memref<128x128xbf16, #tpu.memory_space<vmem>>, %arg5: memref<1x128xf32, #tpu.memory_space<vmem>>, %arg6: memref<16x128xbf16, #tpu.memory_space<vmem>>, %arg7: memref<16x128xbf16, #tpu.memory_space<vmem>>) attributes {dimension_semantics = [#tpu.dimension_semantics<parallel>], iteration_bounds = array<i64: 2>, scalar_prefetch = 0 : i64, scratch_operands = 0 : i64, tpu.core_type = #tpu.core_type<tc>, window_params = [{transform_indices = @transform_0, window_bounds = array<i64: 16, 128>}, {pipeline_mode = #tpu.pipeline_mode<synchronous>, transform_indices = @transform_1, window_bounds = array<i64: 128, 128>}, {pipeline_mode = #tpu.pipeline_mode<synchronous>, transform_indices = @transform_2, window_bounds = array<i64: 1, 128>}, {pipeline_mode = #tpu.pipeline_mode<synchronous>, transform_indices = @transform_3, window_bounds = array<i64: 128, 128>}, {pipeline_mode = #tpu.pipeline_mode<synchronous>, transform_indices = @transform_4, window_bounds = array<i64: 1, 128>}, {transform_indices = @transform_5, window_bounds = array<i64: 16, 128>}, {transform_indices = @transform_6, window_bounds = array<i64: 16, 128>}]} {
    %c0 = arith.constant 0 : index
    %c0_0 = arith.constant 0 : index
    %0 = vector.load %arg1[%c0, %c0_0] : memref<16x128xbf16, #tpu.memory_space<vmem>>, vector<16x128xbf16>
    %c0_1 = arith.constant 0 : index
    %c0_2 = arith.constant 0 : index
    %1 = vector.load %arg2[%c0_1, %c0_2] : memref<128x128xbf16, #tpu.memory_space<vmem>>, vector<128x128xbf16>
    %cst = arith.constant dense<0.000000e+00> : vector<16x128xf32>
    %2 = tpu.matmul %0, %1, %cst {dimension_numbers = #tpu.dot_dimension_numbers<[1], [0], [0], [1], [0, 0, 1, 1], [], []>} : vector<16x128xbf16>, vector<128x128xbf16>, vector<16x128xf32> -> vector<16x128xf32>
    %c0_3 = arith.constant 0 : index
    %c0_4 = arith.constant 0 : index
    %3 = vector.load %arg3[%c0_3, %c0_4] : memref<1x128xf32, #tpu.memory_space<vmem>>, vector<1x128xf32>
    %4 = vector.broadcast %3 : vector<1x128xf32> to vector<16x128xf32>
    %5 = arith.addf %2, %4 : vector<16x128xf32>
    %cst_5 = arith.constant 0.000000e+00 : f32
    %6 = vector.broadcast %cst_5 : f32 to vector<16x128xf32>
    %7 = arith.maximumf %5, %6 : vector<16x128xf32>
    %8 = arith.truncf %7 : vector<16x128xf32> to vector<16x128xbf16>
    %c0_6 = arith.constant 0 : index
    %c0_7 = arith.constant 0 : index
    %9 = vector.load %arg4[%c0_6, %c0_7] : memref<128x128xbf16, #tpu.memory_space<vmem>>, vector<128x128xbf16>
    %cst_8 = arith.constant dense<0.000000e+00> : vector<16x128xf32>
    %10 = tpu.matmul %8, %9, %cst_8 {dimension_numbers = #tpu.dot_dimension_numbers<[1], [0], [0], [1], [0, 0, 1, 1], [], []>} : vector<16x128xbf16>, vector<128x128xbf16>, vector<16x128xf32> -> vector<16x128xf32>
    %c0_9 = arith.constant 0 : index
    %c0_10 = arith.constant 0 : index
    %11 = vector.load %arg5[%c0_9, %c0_10] : memref<1x128xf32, #tpu.memory_space<vmem>>, vector<1x128xf32>
    %12 = vector.broadcast %11 : vector<1x128xf32> to vector<16x128xf32>
    %13 = arith.addf %10, %12 : vector<16x128xf32>
    %14 = arith.truncf %13 : vector<16x128xf32> to vector<16x128xbf16>
    %c0_11 = arith.constant 0 : index
    %c0_12 = arith.constant 0 : index
    %15 = vector.load %arg6[%c0_11, %c0_12] : memref<16x128xbf16, #tpu.memory_space<vmem>>, vector<16x128xbf16>
    tpu.vector_store %arg6[%c0_11, %c0_12], %14 {strides = array<i32>} : memref<16x128xbf16, #tpu.memory_space<vmem>>, vector<16x128xbf16>,
    %cst_13 = arith.constant dense<0xFF800000> : vector<16xf32>
    %16 = vector.multi_reduction <maximumf>, %13, %cst_13 [1] : vector<16x128xf32> to vector<16xf32>
    %17 = vector.shape_cast %16 : vector<16xf32> to vector<16x1xf32>
    %18 = vector.broadcast %17 : vector<16x1xf32> to vector<16x128xf32>
    %19 = arith.subf %13, %18 : vector<16x128xf32>
    %20 = math.exp %19 : vector<16x128xf32>
    %cst_14 = arith.constant dense<0.000000e+00> : vector<16xf32>
    %21 = vector.multi_reduction <add>, %20, %cst_14 [1] : vector<16x128xf32> to vector<16xf32>
    %22 = vector.shape_cast %21 : vector<16xf32> to vector<16x1xf32>
    %23 = tpu.reciprocal %22 {approx = true} : vector<16x1xf32> -> vector<16x1xf32>
    %24 = vector.broadcast %23 : vector<16x1xf32> to vector<16x128xf32>
    %25 = arith.mulf %20, %24 : vector<16x128xf32>
    %26 = arith.truncf %25 : vector<16x128xf32> to vector<16x128xbf16>
    %c0_15 = arith.constant 0 : index
    %c0_16 = arith.constant 0 : index
    %27 = vector.load %arg7[%c0_15, %c0_16] : memref<16x128xbf16, #tpu.memory_space<vmem>>, vector<16x128xbf16>
    tpu.vector_store %arg7[%c0_15, %c0_16], %26 {strides = array<i32>} : memref<16x128xbf16, #tpu.memory_space<vmem>>, vector<16x128xbf16>,
    return
  }
  func.func @transform_0(%arg0: i32) -> (i32, i32) {
    %c0_i32 = arith.constant 0 : i32
    %c0_i32_0 = arith.constant 0 : i32
    return %arg0, %c0_i32 : i32, i32
  }
  func.func @transform_1(%arg0: i32) -> (i32, i32) {
    %c0_i32 = arith.constant 0 : i32
    %c0_i32_0 = arith.constant 0 : i32
    %c0_i32_1 = arith.constant 0 : i32
    return %c0_i32, %c0_i32_0 : i32, i32
  }
  func.func @transform_2(%arg0: i32) -> (i32, i32) {
    %c0_i32 = arith.constant 0 : i32
    %c0_i32_0 = arith.constant 0 : i32
    %c0_i32_1 = arith.constant 0 : i32
    return %c0_i32, %c0_i32_0 : i32, i32
  }
  func.func @transform_3(%arg0: i32) -> (i32, i32) {
    %c0_i32 = arith.constant 0 : i32
    %c0_i32_0 = arith.constant 0 : i32
    %c0_i32_1 = arith.constant 0 : i32
    return %c0_i32, %c0_i32_0 : i32, i32
  }
  func.func @transform_4(%arg0: i32) -> (i32, i32) {
    %c0_i32 = arith.constant 0 : i32
    %c0_i32_0 = arith.constant 0 : i32
    %c0_i32_1 = arith.constant 0 : i32
    return %c0_i32, %c0_i32_0 : i32, i32
  }
  func.func @transform_5(%arg0: i32) -> (i32, i32) {
    %c0_i32 = arith.constant 0 : i32
    %c0_i32_0 = arith.constant 0 : i32
    return %arg0, %c0_i32 : i32, i32
  }
  func.func @transform_6(%arg0: i32) -> (i32, i32) {
    %c0_i32 = arith.constant 0 : i32
    %c0_i32_0 = arith.constant 0 : i32
    return %arg0, %c0_i32 : i32, i32
  }
}

</mosaic_0001>

<llo_original>
// kernel: tpu_custom_call.1
$region0: #{tpu_custom_call.1}
  #allocation0 [shape = 'u32[]', space=smem, size = 0x4, offset = 0x4, fixed_abs, tag = 'smem constant byte address 0x4 - core index']
  #allocation1 [shape = 'u32[144,128]{1,0:T(1,128)}', space=vmem, size = 0x12000, scoped, tag = 'internal scratch']
  %s0 = inlined_call_operand.hbm [shape: bf16[32,128], index: 0, kind: input, shape index: {}]
  %s1 = inlined_call_operand.hbm [shape: bf16[128,128], index: 1, kind: input, shape index: {}]
  %s2 = inlined_call_operand.vmem [shape: f32[1,128], index: 2, kind: input, shape index: {}]
  %s3 = inlined_call_operand.hbm [shape: bf16[128,128], index: 3, kind: input, shape index: {}]
  %s4 = inlined_call_operand.vmem [shape: f32[1,128], index: 4, kind: input, shape index: {}]
  %s5 = inlined_call_operand.hbm [shape: bf16[32,128], index: 5, kind: output, shape index: {0}]
  %s6 = inlined_call_operand.hbm [shape: bf16[32,128], index: 6, kind: output, shape index: {1}]
  %7 = xla_tuple %s5, %s6
  %s8 = sld [smem:[#allocation0]]
  $region73: #{tpu_custom_call.1} parent=0
    _
  %s10 = ssub.s32 1, %s8
  %s11 = scalar_select 0, %s10, %s8
  $region1: #{tpu_custom_call.1} parent=0
    #allocation2 [shape = 'u8[8192]{0}', space=vmem, size = 0x2000, scoped, tag = 'input window, operand 0']
    #allocation3 [shape = 's32[2]{0}', space=sflag, size = 0x8, scoped, tag = 'scoped memory for tpu_custom_call.1']
    #allocation4 [shape = 's32[2]{0}', space=sflag, size = 0x8, scoped, tag = 'scoped memory for tpu_custom_call.1']
    #allocation5 [shape = 'u8[32768]{0}', space=vmem, size = 0x8000, scoped, tag = 'input window, operand 1, single buffered']
    #allocation6 [shape = 's32[1]{0}', space=sflag, size = 0x4, scoped, tag = 'scoped memory for tpu_custom_call.1']
    #allocation7 [shape = 'u8[32768]{0}', space=vmem, size = 0x8000, scoped, tag = 'input window, operand 3, single buffered']
    #allocation8 [shape = 'u8[8192]{0}', space=vmem, size = 0x2000, scoped, tag = 'output window, operand 0']
    #allocation9 [shape = 'u8[8192]{0}', space=vmem, size = 0x2000, scoped, tag = 'output window, operand 1']
    #allocation10 [shape = 's32[2]{0}', space=sflag, size = 0x8, scoped, tag = 'scoped memory for tpu_custom_call.1']
    %12 = vsyncpa [#allocation3], 0
    %s13 = scalar_lea.sflag [#allocation3], 1
    %14 = vsyncpa %s13, 0
    %15 = vsyncpa [#allocation6], 0
    %16 = vsyncpa [#allocation4], 0
    %s17 = scalar_lea.sflag [#allocation4], 1
    %18 = vsyncpa %s17, 0
    %19 = vsyncpa [#allocation10], 0
    %s20 = scalar_lea.sflag [#allocation10], 1
    %21 = vsyncpa %s20, 0
    loop: start=0, step=1, limit=4
    $region2: #{tpu_custom_call.1} parent=1 // loop_pre_header
      _
    $region3: #{tpu_custom_call.1} parent=1 // loop_header
      %s23 = sphi 0, %s27
      %p24 = scmp.ge.s32.totalorder %s23, 4
      %s33 = sphi 0, %s35
      %s36 = sphi 0, %s33
      %s37 = sphi 0, %s36
      %s53 = sphi 0, %s37
      %s57 = sphi 0, %s57
      %s59 = sphi 0, %s57
      %s60 = sphi 0, %s59
      %s74 = sphi 0, %s60
      %s78 = sphi 0, %s78
      %s80 = sphi 0, %s78
      %s81 = sphi 0, %s80
      %s95 = sphi 0, %s81
      %s99 = sphi 0, %s99
      %s101 = sphi 0, %s99
      %s102 = sphi 0, %s101
      %s116 = sphi 0, %s102
      %s120 = sphi 0, %s120
      %s122 = sphi 0, %s120
      %s123 = sphi 0, %s122
      %s137 = sphi 0, %s123
      %s143 = sphi 0, %s145
      %s146 = sphi 0, %s143
      %s147 = sphi 0, %s146
      %s163 = sphi 0, %s147
      %s169 = sphi 0, %s171
      %s172 = sphi 0, %s169
      %s173 = sphi 0, %s172
      %s189 = sphi 0, %s173
    $region4: #{tpu_custom_call.1} parent=1 // loop_header_branch
      %26 = sbr.rel (%p24) target = $region8
    $region5: #{tpu_custom_call.1} parent=1 // loop_body
      %s28 = ssub.s32 %s23, 1
      %s29 = ssub.s32 %s23, 2
      %s30 = sadd.s32 %s23, 1
      %s31 = ssub.s32 %s23, %s30
      %p32 = scmp.eq.s32.totalorder %s31, 0
      %s34 = sadd.s32 %s33, 1
      %s35 = scalar_select %p32, %s33, %s34
      %p38 = pneg %p32
      %p39 = scmp.eq.s32.totalorder %s23, 1
      %p40 = por %p38, %p39
      %p41 = scmp.ne.s32.totalorder %s33, %s36
      %p42 = scmp.eq.s32.totalorder %s23, 0
      %p43 = por %p41, %p42
      %p44 = scmp.ne.s32.totalorder %s33, %s36
      %p45 = scmp.eq.s32.totalorder %s28, 1
      %p46 = por %p44, %p45
      %p47 = scmp.ne.s32.totalorder %s36, %s37
      %p48 = scmp.eq.s32.totalorder %s28, 0
      %p49 = por %p47, %p48
      %p50 = scmp.ne.s32.totalorder %s36, %s37
      %p51 = scmp.eq.s32.totalorder %s29, 1
      %p52 = por %p50, %p51
      %p54 = scmp.ne.s32.totalorder %s37, %s53
      %p55 = scmp.eq.s32.totalorder %s29, 0
      %p56 = por %p54, %p55
      %s58 = sadd.s32 %s57, 1
      %p61 = scmp.eq.s32.totalorder %s23, 1
      %p62 = scmp.ne.s32.totalorder %s57, %s59
      %p63 = scmp.eq.s32.totalorder %s23, 0
      %p64 = por %p62, %p63
      %p65 = scmp.ne.s32.totalorder %s57, %s59
      %p66 = scmp.eq.s32.totalorder %s28, 1
      %p67 = por %p65, %p66
      %p68 = scmp.ne.s32.totalorder %s59, %s60
      %p69 = scmp.eq.s32.totalorder %s28, 0
      %p70 = por %p68, %p69
      %p71 = scmp.ne.s32.totalorder %s59, %s60
      %p72 = scmp.eq.s32.totalorder %s29, 1
      %p73 = por %p71, %p72
      %p75 = scmp.ne.s32.totalorder %s60, %s74
      %p76 = scmp.eq.s32.totalorder %s29, 0
      %p77 = por %p75, %p76
      %s79 = sadd.s32 %s78, 1
      %p82 = scmp.eq.s32.totalorder %s23, 1
      %p83 = scmp.ne.s32.totalorder %s78, %s80
      %p84 = scmp.eq.s32.totalorder %s23, 0
      %p85 = por %p83, %p84
      %p86 = scmp.ne.s32.totalorder %s78, %s80
      %p87 = scmp.eq.s32.totalorder %s28, 1
      %p88 = por %p86, %p87
      %p89 = scmp.ne.s32.totalorder %s80, %s81
      %p90 = scmp.eq.s32.totalorder %s28, 0
      %p91 = por %p89, %p90
      %p92 = scmp.ne.s32.totalorder %s80, %s81
      %p93 = scmp.eq.s32.totalorder %s29, 1
      %p94 = por %p92, %p93
      %p96 = scmp.ne.s32.totalorder %s81, %s95
      %p97 = scmp.eq.s32.totalorder %s29, 0
      %p98 = por %p96, %p97
      %s100 = sadd.s32 %s99, 1
      %p103 = scmp.eq.s32.totalorder %s23, 1
      %p104 = scmp.ne.s32.totalorder %s99, %s101
      %p105 = scmp.eq.s32.totalorder %s23, 0
      %p106 = por %p104, %p105
      %p107 = scmp.ne.s32.totalorder %s99, %s101
      %p108 = scmp.eq.s32.totalorder %s28, 1
      %p109 = por %p107, %p108
      %p110 = scmp.ne.s32.totalorder %s101, %s102
      %p111 = scmp.eq.s32.totalorder %s28, 0
      %p112 = por %p110, %p111
      %p113 = scmp.ne.s32.totalorder %s101, %s102
      %p114 = scmp.eq.s32.totalorder %s29, 1
      %p115 = por %p113, %p114
      %p117 = scmp.ne.s32.totalorder %s102, %s116
      %p118 = scmp.eq.s32.totalorder %s29, 0
      %p119 = por %p117, %p118
      %s121 = sadd.s32 %s120, 1
      %p124 = scmp.eq.s32.totalorder %s23, 1
      %p125 = scmp.ne.s32.totalorder %s120, %s122
      %p126 = scmp.eq.s32.totalorder %s23, 0
      %p127 = por %p125, %p126
      %p128 = scmp.ne.s32.totalorder %s120, %s122
      %p129 = scmp.eq.s32.totalorder %s28, 1
      %p130 = por %p128, %p129
      %p131 = scmp.ne.s32.totalorder %s122, %s123
      %p132 = scmp.eq.s32.totalorder %s28, 0
      %p133 = por %p131, %p132
      %p134 = scmp.ne.s32.totalorder %s122, %s123
      %p135 = scmp.eq.s32.totalorder %s29, 1
      %p136 = por %p134, %p135
      %p138 = scmp.ne.s32.totalorder %s123, %s137
      %p139 = scmp.eq.s32.totalorder %s29, 0
      %p140 = por %p138, %p139
      %s141 = ssub.s32 %s23, %s30
      %p142 = scmp.eq.s32.totalorder %s141, 0
      %s144 = sadd.s32 %s143, 1
      %s145 = scalar_select %p142, %s143, %s144
      %p148 = pneg %p142
      %p149 = scmp.eq.s32.totalorder %s23, 1
      %p150 = por %p148, %p149
      %p151 = scmp.ne.s32.totalorder %s143, %s146
      %p152 = scmp.eq.s32.totalorder %s23, 0
      %p153 = por %p151, %p152
      %p154 = scmp.ne.s32.totalorder %s143, %s146
      %p155 = scmp.eq.s32.totalorder %s28, 1
      %p156 = por %p154, %p155
      %p157 = scmp.ne.s32.totalorder %s146, %s147
      %p158 = scmp.eq.s32.totalorder %s28, 0
      %p159 = por %p157, %p158
      %p160 = scmp.ne.s32.totalorder %s146, %s147
      %p161 = scmp.eq.s32.totalorder %s29, 1
      %p162 = por %p160, %p161
      %p164 = scmp.ne.s32.totalorder %s147, %s163
      %p165 = scmp.eq.s32.totalorder %s29, 0
      %p166 = por %p164, %p165
      %s167 = ssub.s32 %s23, %s30
      %p168 = scmp.eq.s32.totalorder %s167, 0
      %s170 = sadd.s32 %s169, 1
      %s171 = scalar_select %p168, %s169, %s170
      %p174 = pneg %p168
      %p175 = scmp.eq.s32.totalorder %s23, 1
      %p176 = por %p174, %p175
      %p177 = scmp.ne.s32.totalorder %s169, %s172
      %p178 = scmp.eq.s32.totalorder %s23, 0
      %p179 = por %p177, %p178
      %p180 = scmp.ne.s32.totalorder %s169, %s172
      %p181 = scmp.eq.s32.totalorder %s28, 1
      %p182 = por %p180, %p181
      %p183 = scmp.ne.s32.totalorder %s172, %s173
      %p184 = scmp.eq.s32.totalorder %s28, 0
      %p185 = por %p183, %p184
      %p186 = scmp.ne.s32.totalorder %s172, %s173
      %p187 = scmp.eq.s32.totalorder %s29, 1
      %p188 = por %p186, %p187
      %p190 = scmp.ne.s32.totalorder %s173, %s189
      %p191 = scmp.eq.s32.totalorder %s29, 0
      %p192 = por %p190, %p191
      %p193 = scmp.le.s32.totalorder 1, %s23
      %p194 = scmp.lt.s32.totalorder %s23, 3
      %p195 = pnand %p193, %p194
      %p196 = pneg %p195
      // Predicated region
      $region9: #{tpu_custom_call.1} parent=5 // pred_check
        _
      $region10: #{tpu_custom_call.1} parent=5 // pred_check_branch
        %198 = sbr.rel (%p195) target = $region12
      $region11: #{tpu_custom_call.1} parent=5 // pred_region
        %s199 = ssub.s32 %s23, 1
        // Predicated region
        $region13: #{tpu_custom_call.1} parent=11 // pred_check
          %p200 = pneg %p70
        $region14: #{tpu_custom_call.1} parent=11 // pred_check_branch
          %202 = sbr.rel (%p200) target = $region16
        $region15: #{tpu_custom_call.1} parent=11 // pred_region
          %s204 = ssub.s32 1024, 1024
          %205 = vsyncadd [#allocation6], %s204
          %s206 = sshll.u32 [#allocation5], 4
          %s207 = int_to_ptr.vmem [resolvable:$true] %s206
          %212 = dma.hbm_to_vmem [thread:$0]  %s1, 1024, %s207, [#allocation6], 64, 64, 4
        $region16: #{tpu_custom_call.1} parent=11 // pred_fallthru
          _
        // Predicated region
        $region17: #{tpu_custom_call.1} parent=11 // pred_check
          %p213 = pneg %p91
        $region18: #{tpu_custom_call.1} parent=11 // pred_check_branch
          %215 = sbr.rel (%p213) target = $region20
        $region19: #{tpu_custom_call.1} parent=11 // pred_region
          _
        $region20: #{tpu_custom_call.1} parent=11 // pred_fallthru
          _
        // Predicated region
        $region21: #{tpu_custom_call.1} parent=11 // pred_check
          %p216 = pneg %p112
        $region22: #{tpu_custom_call.1} parent=11 // pred_check_branch
          %218 = sbr.rel (%p216) target = $region24
        $region23: #{tpu_custom_call.1} parent=11 // pred_region
          %s220 = ssub.s32 1024, 1024
          %221 = vsyncadd [#allocation6], %s220
          %s222 = sshll.u32 [#allocation7], 4
          %s223 = int_to_ptr.vmem [resolvable:$true] %s222
          %228 = dma.hbm_to_vmem [thread:$0]  %s3, 1024, %s223, [#allocation6], 64, 64, 4
        $region24: #{tpu_custom_call.1} parent=11 // pred_fallthru
          _
        // Predicated region
        $region25: #{tpu_custom_call.1} parent=11 // pred_check
          %p229 = pneg %p133
        $region26: #{tpu_custom_call.1} parent=11 // pred_check_branch
          %231 = sbr.rel (%p229) target = $region28
        $region27: #{tpu_custom_call.1} parent=11 // pred_region
          _
        $region28: #{tpu_custom_call.1} parent=11 // pred_fallthru
          _
      $region12: #{tpu_custom_call.1} parent=5 // pred_fallthru
        _
      %p232 = scmp.lt.s32.totalorder %s23, 2
      // Predicated region
      $region29: #{tpu_custom_call.1} parent=5 // pred_check
        %p233 = pneg %p232
      $region30: #{tpu_custom_call.1} parent=5 // pred_check_branch
        %235 = sbr.rel (%p233) target = $region32
      $region31: #{tpu_custom_call.1} parent=5 // pred_region
        // Predicated region
        $region33: #{tpu_custom_call.1} parent=31 // pred_check
          %p236 = pneg %p43
        $region34: #{tpu_custom_call.1} parent=31 // pred_check_branch
          %238 = sbr.rel (%p236) target = $region36
        $region35: #{tpu_custom_call.1} parent=31 // pred_region
          %s239 = sand.u32 %s33, 1
          %s240 = scalar_lea.sflag [#allocation3], %s239
          %s241 = sand.u32 %s33, 1
          %s242 = smul.addr %s241, 8
          %s243 = scalar_lea.vmem [#allocation2], %s242
          %s244 = smul.u32 2, %s23
          %s246 = ssub.s32 128, 128
          %247 = vsyncadd %s240, %s246
          %s248 = smul.addr %s244, 64
          %s249 = scalar_lea.hbm %s0, %s248
          %s250 = sshll.u32 %s243, 4
          %s251 = int_to_ptr.vmem [resolvable:$true] %s250
          %256 = dma.hbm_to_vmem [thread:$0]  %s249, 128, %s251, %s240, 64, 64, 4
        $region36: #{tpu_custom_call.1} parent=31 // pred_fallthru
          _
      $region32: #{tpu_custom_call.1} parent=5 // pred_fallthru
        _
      %p257 = scmp.le.s32.totalorder 1, %s23
      %p258 = scmp.lt.s32.totalorder %s23, 3
      %p259 = pnand %p257, %p258
      %p260 = pneg %p259
      // Predicated region
      $region37: #{tpu_custom_call.1} parent=5 // pred_check
        _
      $region38: #{tpu_custom_call.1} parent=5 // pred_check_branch
        %262 = sbr.rel (%p259) target = $region40
      $region39: #{tpu_custom_call.1} parent=5 // pred_region
        %s263 = ssub.s32 %s23, 1
        %s264 = sand.u32 %s36, 1
        %s265 = scalar_lea.sflag [#allocation3], %s264
        %s266 = sand.u32 %s36, 1
        %s267 = smul.addr %s266, 8
        %s268 = scalar_lea.vmem [#allocation2], %s267
        // Predicated region
        $region41: #{tpu_custom_call.1} parent=39 // pred_check
          %p269 = pneg %p49
        $region42: #{tpu_custom_call.1} parent=39 // pred_check_branch
          %271 = sbr.rel (%p269) target = $region44
        $region43: #{tpu_custom_call.1} parent=39 // pred_region
          %272 = dma.done %s265, 128
        $region44: #{tpu_custom_call.1} parent=39 // pred_fallthru
          _
        // Predicated region
        $region45: #{tpu_custom_call.1} parent=39 // pred_check
          %p273 = pneg %p70
        $region46: #{tpu_custom_call.1} parent=39 // pred_check_branch
          %275 = sbr.rel (%p273) target = $region48
        $region47: #{tpu_custom_call.1} parent=39 // pred_region
          %276 = dma.done [#allocation6], 1024
        $region48: #{tpu_custom_call.1} parent=39 // pred_fallthru
          _
        // Predicated region
        $region49: #{tpu_custom_call.1} parent=39 // pred_check
          %p277 = pneg %p112
        $region50: #{tpu_custom_call.1} parent=39 // pred_check_branch
          %279 = sbr.rel (%p277) target = $region52
        $region51: #{tpu_custom_call.1} parent=39 // pred_region
          %280 = dma.done [#allocation6], 1024
        $region52: #{tpu_custom_call.1} parent=39 // pred_fallthru
          _
        %s281 = sand.u32 %s36, 1
        %s282 = scalar_lea.sflag [#allocation3], %s281
        %s283 = sand.u32 %s36, 1
        %s284 = smul.addr %s283, 8
        %s285 = scalar_lea.vmem [#allocation2], %s284
        %p286 = pneg %p49
        %p287 = pneg %p46
        %p288 = pneg %p70
        %p289 = pneg %p67
        %p290 = pneg %p91
        %p291 = pneg %p88
        %p292 = pneg %p112
        %p293 = pneg %p109
        %p294 = pneg %p133
        %p295 = pneg %p130
        %p296 = pneg %p159
        %p297 = pneg %p156
        %s298 = sand.u32 %s146, 1
        %s299 = scalar_lea.sflag [#allocation4], %s298
        %s300 = sand.u32 %s146, 1
        %s301 = smul.addr %s300, 8
        %s302 = scalar_lea.vmem [#allocation8], %s301
        %p303 = pneg %p185
        %p304 = pneg %p182
        %s305 = sand.u32 %s172, 1
        %s306 = scalar_lea.sflag [#allocation10], %s305
        %s307 = sand.u32 %s172, 1
        %s308 = smul.addr %s307, 8
        %s309 = scalar_lea.vmem [#allocation9], %s308
        %s310 = smul.u32 2, %s28
        %s311 = smul.u32 2, %s28
        %s312 = smul.u32 2, %s28
        %v314 = vld [vmem:[%s268] sm:$0xf]
        %v315 = vld [vmem:[%s268 + $0x4] sm:$0xf]
        %v316 = vld [vmem:[#allocation5] sm:$0xf]
        %v317 = vld [vmem:[#allocation5 + $0x4] sm:$0xf]
        %v318 = vld [vmem:[#allocation5 + $0x8] sm:$0xf]
        %v319 = vld [vmem:[#allocation5 + $0xc] sm:$0xf]
        %v320 = vld [vmem:[#allocation5 + $0x10] sm:$0xf]
        %v321 = vld [vmem:[#allocation5 + $0x14] sm:$0xf]
        %v322 = vld [vmem:[#allocation5 + $0x18] sm:$0xf]
        %v323 = vld [vmem:[#allocation5 + $0x1c] sm:$0xf]
        %v324 = vld [vmem:[#allocation5 + $0x20] sm:$0xf]
        %v325 = vld [vmem:[#allocation5 + $0x24] sm:$0xf]
        %v326 = vld [vmem:[#allocation5 + $0x28] sm:$0xf]
        %v327 = vld [vmem:[#allocation5 + $0x2c] sm:$0xf]
        %v328 = vld [vmem:[#allocation5 + $0x30] sm:$0xf]
        %v329 = vld [vmem:[#allocation5 + $0x34] sm:$0xf]
        %v330 = vld [vmem:[#allocation5 + $0x38] sm:$0xf]
        %v331 = vld [vmem:[#allocation5 + $0x3c] sm:$0xf]
        %v332 = vld [vmem:[%s2] sm:$0x1]
        %v334 = vlaneseq
        %v335 = vshrl.u32 %v334, 7
        %v336 = vsub.s32 0, %v335
        %v337 = vrot.slane %v332, %v336
        %v341 = vunpack.c.l.b16 %v314
        %v342 = vunpack.c.l.b16 %v315
        %v343 = vpack.c.b16 %v342, %v341
        %v361 = vunpack.c.l.b16 %v316
        %v362 = vunpack.c.l.b16 %v317
        %v363 = vunpack.c.l.b16 %v318
        %v364 = vunpack.c.l.b16 %v319
        %v365 = vunpack.c.l.b16 %v320
        %v366 = vunpack.c.l.b16 %v321
        %v367 = vunpack.c.l.b16 %v322
        %v368 = vunpack.c.l.b16 %v323
        %v369 = vunpack.c.l.b16 %v324
        %v370 = vunpack.c.l.b16 %v325
        %v371 = vunpack.c.l.b16 %v326
        %v372 = vunpack.c.l.b16 %v327
        %v373 = vunpack.c.l.b16 %v328
        %v374 = vunpack.c.l.b16 %v329
        %v375 = vunpack.c.l.b16 %v330
        %v376 = vunpack.c.l.b16 %v331
        %v377 = vpack.c.b16 %v362, %v361
        %v378 = vpack.c.b16 %v364, %v363
        %v379 = vpack.c.b16 %v366, %v365
        %v380 = vpack.c.b16 %v368, %v367
        %v381 = vpack.c.b16 %v370, %v369
        %v382 = vpack.c.b16 %v372, %v371
        %v383 = vpack.c.b16 %v374, %v373
        %v384 = vpack.c.b16 %v376, %v375
        %393 = vmatprep.subr.bf16.mxu0 0
        %394 = vmatpush1.bf16.msra.mxu0 %v384
        %395 = vmatprep.subr.bf16.mxu0 0
        %396 = vmatpush1.bf16.msra.mxu0 %v383
        %397 = vmatprep.subr.bf16.mxu0 0
        %398 = vmatpush1.bf16.msra.mxu0 %v382
        %399 = vmatprep.subr.bf16.mxu0 0
        %400 = vmatpush1.bf16.msra.mxu0 %v381
        %401 = vmatprep.subr.bf16.mxu0 0
        %402 = vmatpush1.bf16.msra.mxu0 %v380
        %403 = vmatprep.subr.bf16.mxu0 0
        %404 = vmatpush1.bf16.msra.mxu0 %v379
        %405 = vmatprep.subr.bf16.mxu0 0
        %406 = vmatpush1.bf16.msra.mxu0 %v378
        %407 = vmatprep.subr.bf16.mxu0 0
        %408 = vmatpush1.bf16.msra.mxu0 %v377
        %409 = vmatprep.subr.bf16.mxu0 0
        %410 = vmatpush2.bf16.msra.mxu0 0
        %411 = vmatprep.subr.bf16.mxu0 0
        %412 = vmatpush2.bf16.msra.mxu0 0
        %413 = vmatprep.subr.bf16.mxu0 0
        %414 = vmatpush2.bf16.msra.mxu0 0
        %415 = vmatprep.subr.bf16.mxu0 0
        %416 = vmatpush2.bf16.msra.mxu0 0
        %417 = vmatprep.subr.bf16.mxu0 0
        %418 = vmatpush2.bf16.msra.mxu0 0
        %419 = vmatprep.subr.bf16.mxu0 0
        %420 = vmatpush2.bf16.msra.mxu0 0
        %421 = vmatprep.subr.bf16.mxu0 0
        %422 = vmatpush2.bf16.msra.mxu0 0
        %423 = vmatprep.subr.bf16.mxu0 0
        %424 = vmatpush2.bf16.msra.mxu0 0
        %425 = vmatprep.mubr.bf16.mxu0 0
        %426 = vmatmul.mubr.bf16.gmra.mxu0 %v343
        %v427 = vpop.f32.mrf.mxu0
        %v428 = vadd.f32 %v337, %v427
        %v429 = vpop.f32.mrf.mxu0
        %v430 = vpop.f32.mrf.mxu0
        %v431 = vadd.f32 %v337, %v430
        %v432 = vpop.f32.mrf.mxu0
        %433 = vdwg.mxu0
        %v434 = vmax.f32 %v428, 0.0
        %v435 = vmax.f32 %v431, 0.0
        %v436 = vpack.c.bf16 %v435, %v434
        %v437 = vld [vmem:[#allocation7] sm:$0xf]
        %v438 = vld [vmem:[#allocation7 + $0x4] sm:$0xf]
        %v439 = vld [vmem:[#allocation7 + $0x8] sm:$0xf]
        %v440 = vld [vmem:[#allocation7 + $0xc] sm:$0xf]
        %v441 = vld [vmem:[#allocation7 + $0x10] sm:$0xf]
        %v442 = vld [vmem:[#allocation7 + $0x14] sm:$0xf]
        %v443 = vld [vmem:[#allocation7 + $0x18] sm:$0xf]
        %v444 = vld [vmem:[#allocation7 + $0x1c] sm:$0xf]
        %v445 = vld [vmem:[#allocation7 + $0x20] sm:$0xf]
        %v446 = vld [vmem:[#allocation7 + $0x24] sm:$0xf]
        %v447 = vld [vmem:[#allocation7 + $0x28] sm:$0xf]
        %v448 = vld [vmem:[#allocation7 + $0x2c] sm:$0xf]
        %v449 = vld [vmem:[#allocation7 + $0x30] sm:$0xf]
        %v450 = vld [vmem:[#allocation7 + $0x34] sm:$0xf]
        %v451 = vld [vmem:[#allocation7 + $0x38] sm:$0xf]
        %v452 = vld [vmem:[#allocation7 + $0x3c] sm:$0xf]
        %v453 = vld [vmem:[%s4] sm:$0x1]
        %v455 = vlaneseq
        %v456 = vshrl.u32 %v455, 7
        %v457 = vsub.s32 0, %v456
        %v458 = vrot.slane %v453, %v457
        %v476 = vunpack.c.l.b16 %v437
        %v477 = vunpack.c.l.b16 %v438
        %v478 = vunpack.c.l.b16 %v439
        %v479 = vunpack.c.l.b16 %v440
        %v480 = vunpack.c.l.b16 %v441
        %v481 = vunpack.c.l.b16 %v442
        %v482 = vunpack.c.l.b16 %v443
        %v483 = vunpack.c.l.b16 %v444
        %v484 = vunpack.c.l.b16 %v445
        %v485 = vunpack.c.l.b16 %v446
        %v486 = vunpack.c.l.b16 %v447
        %v487 = vunpack.c.l.b16 %v448
        %v488 = vunpack.c.l.b16 %v449
        %v489 = vunpack.c.l.b16 %v450
        %v490 = vunpack.c.l.b16 %v451
        %v491 = vunpack.c.l.b16 %v452
        %v492 = vpack.c.b16 %v477, %v476
        %v493 = vpack.c.b16 %v479, %v478
        %v494 = vpack.c.b16 %v481, %v480
        %v495 = vpack.c.b16 %v483, %v482
        %v496 = vpack.c.b16 %v485, %v484
        %v497 = vpack.c.b16 %v487, %v486
        %v498 = vpack.c.b16 %v489, %v488
        %v499 = vpack.c.b16 %v491, %v490
        %508 = vmatprep.subr.bf16.mxu0 0
        %509 = vmatpush1.bf16.msra.mxu0 %v499
        %510 = vmatprep.subr.bf16.mxu0 0
        %511 = vmatpush1.bf16.msra.mxu0 %v498
        %512 = vmatprep.subr.bf16.mxu0 0
        %513 = vmatpush1.bf16.msra.mxu0 %v497
        %514 = vmatprep.subr.bf16.mxu0 0
        %515 = vmatpush1.bf16.msra.mxu0 %v496
        %516 = vmatprep.subr.bf16.mxu0 0
        %517 = vmatpush1.bf16.msra.mxu0 %v495
        %518 = vmatprep.subr.bf16.mxu0 0
        %519 = vmatpush1.bf16.msra.mxu0 %v494
        %520 = vmatprep.subr.bf16.mxu0 0
        %521 = vmatpush1.bf16.msra.mxu0 %v493
        %522 = vmatprep.subr.bf16.mxu0 0
        %523 = vmatpush1.bf16.msra.mxu0 %v492
        %524 = vmatprep.subr.bf16.mxu0 0
        %525 = vmatpush2.bf16.msra.mxu0 0
        %526 = vmatprep.subr.bf16.mxu0 0
        %527 = vmatpush2.bf16.msra.mxu0 0
        %528 = vmatprep.subr.bf16.mxu0 0
        %529 = vmatpush2.bf16.msra.mxu0 0
        %530 = vmatprep.subr.bf16.mxu0 0
        %531 = vmatpush2.bf16.msra.mxu0 0
        %532 = vmatprep.subr.bf16.mxu0 0
        %533 = vmatpush2.bf16.msra.mxu0 0
        %534 = vmatprep.subr.bf16.mxu0 0
        %535 = vmatpush2.bf16.msra.mxu0 0
        %536 = vmatprep.subr.bf16.mxu0 0
        %537 = vmatpush2.bf16.msra.mxu0 0
        %538 = vmatprep.subr.bf16.mxu0 0
        %539 = vmatpush2.bf16.msra.mxu0 0
        %540 = vmatprep.mubr.bf16.mxu0 0
        %541 = vmatmul.mubr.bf16.gmra.mxu0 %v436
        %v542 = vpop.f32.mrf.mxu0
        %v543 = vadd.f32 %v458, %v542
        %v544 = vpop.f32.mrf.mxu0
        %v545 = vpop.f32.mrf.mxu0
        %v546 = vadd.f32 %v458, %v545
        %v547 = vpop.f32.mrf.mxu0
        %548 = vdwg.mxu0
        %v549 = vpack.c.bf16 %v546, %v543
        %v551 = vunpack.c.l.b16 %v549
        %v552 = vunpack.c.h.b16 %v549
        %v553 = vpack.c.b16 %v551, %v551
        %v554 = vpack.c.b16 %v552, %v552
        %557 = vst [vmem:[%s302] sm:$0xf] %v553
        %558 = vst [vmem:[%s302 + $0x4] sm:$0xf] %v554
        %559 = vmax.xlane.f32.xlu0 %v543
        %v560 = vpop.xlane.xlu0 %559
        %561 = vmax.xlane.f32.xlu0 %v546
        %v562 = vpop.xlane.xlu0 %561
        %v563 = vsub.f32 %v543, %v560
        %v564 = vsub.f32 %v546, %v562
        %v565 = vmul.f32 %v563, 1.442695
        %v566 = vpow.pop %v565
        %v567 = vmul.f32 %v564, 1.442695
        %v568 = vpow.pop %v567
        %569 = vadd.xlane.f32.xlu0 %v566
        %v570 = vpop.xlane.xlu0 %569
        %571 = vadd.xlane.f32.xlu0 %v568
        %v572 = vpop.xlane.xlu0 %571
        %v573 = vrcp.pop %v570
        %v574 = vrcp.pop %v572
        %v575 = vmul.f32 %v566, %v573
        %v576 = vmul.f32 %v568, %v574
        %v577 = vpack.c.bf16 %v576, %v575
        %v579 = vunpack.c.l.b16 %v577
        %v580 = vunpack.c.h.b16 %v577
        %v581 = vpack.c.b16 %v579, %v579
        %v582 = vpack.c.b16 %v580, %v580
        %585 = vst [vmem:[%s309] sm:$0xf] %v581
        %586 = vst [vmem:[%s309 + $0x4] sm:$0xf] %v582
        %s587 = sand.u32 %s146, 1
        %s588 = scalar_lea.sflag [#allocation4], %s587
        %s589 = sand.u32 %s146, 1
        %s590 = smul.addr %s589, 8
        %s591 = scalar_lea.vmem [#allocation8], %s590
        %s592 = sand.u32 %s172, 1
        %s593 = scalar_lea.sflag [#allocation10], %s592
        %s594 = sand.u32 %s172, 1
        %s595 = smul.addr %s594, 8
        %s596 = scalar_lea.vmem [#allocation9], %s595
        // Predicated region
        $region53: #{tpu_custom_call.1} parent=39 // pred_check
          %p597 = pneg %p156
        $region54: #{tpu_custom_call.1} parent=39 // pred_check_branch
          %599 = sbr.rel (%p597) target = $region56
        $region55: #{tpu_custom_call.1} parent=39 // pred_region
          %s600 = smul.u32 2, %s28
          %s602 = ssub.s32 128, 128
          %603 = vsyncadd %s588, %s602
          %s604 = smul.addr %s600, 64
          %s605 = scalar_lea.hbm %s5, %s604
          %s606 = sshll.u32 %s591, 4
          %s607 = int_to_ptr.vmem [resolvable:$true] %s606
          %612 = dma.vmem_to_hbm [thread:$0]  %s607, 128, %s605, %s588, 64, 64, 4
        $region56: #{tpu_custom_call.1} parent=39 // pred_fallthru
          _
        // Predicated region
        $region57: #{tpu_custom_call.1} parent=39 // pred_check
          %p613 = pneg %p182
        $region58: #{tpu_custom_call.1} parent=39 // pred_check_branch
          %615 = sbr.rel (%p613) target = $region60
        $region59: #{tpu_custom_call.1} parent=39 // pred_region
          %s616 = smul.u32 2, %s28
          %s618 = ssub.s32 128, 128
          %619 = vsyncadd %s593, %s618
          %s620 = smul.addr %s616, 64
          %s621 = scalar_lea.hbm %s6, %s620
          %s622 = sshll.u32 %s596, 4
          %s623 = int_to_ptr.vmem [resolvable:$true] %s622
          %628 = dma.vmem_to_hbm [thread:$0]  %s623, 128, %s621, %s593, 64, 64, 4
        $region60: #{tpu_custom_call.1} parent=39 // pred_fallthru
          _
      $region40: #{tpu_custom_call.1} parent=5 // pred_fallthru
        _
      %p629 = scmp.le.s32.totalorder 2, %s23
      // Predicated region
      $region61: #{tpu_custom_call.1} parent=5 // pred_check
        %p630 = pneg %p629
      $region62: #{tpu_custom_call.1} parent=5 // pred_check_branch
        %632 = sbr.rel (%p630) target = $region64
      $region63: #{tpu_custom_call.1} parent=5 // pred_region
        %s633 = ssub.s32 %s23, 2
        // Predicated region
        $region65: #{tpu_custom_call.1} parent=63 // pred_check
          %p634 = pneg %p162
        $region66: #{tpu_custom_call.1} parent=63 // pred_check_branch
          %636 = sbr.rel (%p634) target = $region68
        $region67: #{tpu_custom_call.1} parent=63 // pred_region
          %s637 = sand.u32 %s147, 1
          %s638 = scalar_lea.sflag [#allocation4], %s637
          %s639 = sand.u32 %s147, 1
          %s640 = smul.addr %s639, 8
          %s641 = scalar_lea.vmem [#allocation8], %s640
          %642 = dma.done %s638, 128
        $region68: #{tpu_custom_call.1} parent=63 // pred_fallthru
          _
        // Predicated region
        $region69: #{tpu_custom_call.1} parent=63 // pred_check
          %p643 = pneg %p188
        $region70: #{tpu_custom_call.1} parent=63 // pred_check_branch
          %645 = sbr.rel (%p643) target = $region72
        $region71: #{tpu_custom_call.1} parent=63 // pred_region
          %s646 = sand.u32 %s173, 1
          %s647 = scalar_lea.sflag [#allocation10], %s646
          %s648 = sand.u32 %s173, 1
          %s649 = smul.addr %s648, 8
          %s650 = scalar_lea.vmem [#allocation9], %s649
          %651 = dma.done %s647, 128
        $region72: #{tpu_custom_call.1} parent=63 // pred_fallthru
          _
      $region64: #{tpu_custom_call.1} parent=5 // pred_fallthru
        _
    $region6: #{tpu_custom_call.1} parent=1 // loop_footer
      %s27 = sadd.s32 1, %s23
    $region7: #{tpu_custom_call.1} parent=1 // loop_footer_branch
      %22 = sbr.rel target = $region3
    $region8: #{tpu_custom_call.1} parent=1 // loop_exit
      _
    %652 = vsyncpa [#allocation3], 1
    %s653 = scalar_lea.sflag [#allocation3], 1
    %654 = vsyncpa %s653, 1
    %655 = vsyncpa [#allocation6], 1
    %656 = vsyncpa [#allocation4], 1
    %s657 = scalar_lea.sflag [#allocation4], 1
    %658 = vsyncpa %s657, 1
    %659 = vsyncpa [#allocation10], 1
    %s660 = scalar_lea.sflag [#allocation10], 1
    %661 = vsyncpa %s660, 1

</llo_original>
